<compile_context>
chip_gen: v7x
topology: tpu7x:2x2x1
jax: 0.10.0
libtpu: 0.0.40
codegen_flags: <defaults>
</compile_context>

<pallas_src>
import jax
import jax.numpy as jnp
import numpy as np
from jax.experimental import pallas as pl
from jax.experimental.pallas import tpu as pltpu


def _irl_block_kernel(patches_ref, w_ref, o_ref):
    """One grid step = one image.

    patches_ref: (1, Kpad, M)  bf16  im2col'd input (+ ones row for bias, zero pad)
    w_ref:       (Cout, Kpad)  bf16  BN-folded weights (+ bias column, zero pad)
    o_ref:       (1, Cout, M)  f32   lane-dense output
    """
    # Single MXU matmul; bias is folded in via the ones row, accumulate in f32.
    acc = jnp.dot(w_ref[...], patches_ref[0],
                  preferred_element_type=jnp.float32)          # (Cout, M) f32
    # LeakyReLU(0.1): 2 VALU ops per vreg, epilogue stays f32 until the store.
    o_ref[0] = jnp.maximum(acc, 0.1 * acc).astype(o_ref.dtype)


def irl_block_forward(x_nchw, conv_w_oihw, gamma, beta, running_mean, running_var,
                      eps=1e-5):
    """Forward pass of IRL_Block(pool=False, dropout=0.0), eval-mode BN.

    x_nchw:      (N, Cin, H, W)    float32
    conv_w_oihw: (Cout, Cin, 3, 3) PyTorch-layout conv weight
    returns:     (N, Cout, H, W)   float32
    """
    N, Cin, H, W = x_nchw.shape
    Cout = conv_w_oihw.shape[0]
    K = 9 * Cin
    M = H * W
    Kb = K + 1                         # +1 ones row: folds the BN bias into the matmul
    Kpad = ((Kb + 15) // 16) * 16      # bf16 packs 16 rows per sublane -> align K

    # --- glue (plain JAX): im2col + BN folding, all in NCHW (no layout transpose) ---
    # TODO(synk): at production channel counts, fuse the 9 taps in-kernel
    # (pl.ds row slices + pltpu.roll) instead of materializing patches in HBM.
    x_pad = jnp.pad(x_nchw, ((0, 0), (0, 0), (1, 1), (1, 1)))          # padding=1
    taps = [x_pad[:, :, dy:dy + H, dx:dx + W]                          # 9 shifted views
            for dy in range(3) for dx in range(3)]
    patches = jnp.stack(taps, axis=1).reshape(N, K, M)                 # tap-major K
    patches = jnp.concatenate(
        [patches,
         jnp.ones((N, 1, M), patches.dtype),                           # bias row
         jnp.zeros((N, Kpad - Kb, M), patches.dtype)], axis=1          # K alignment pad
    ).astype(jnp.bfloat16)

    scale = gamma / jnp.sqrt(running_var + eps)                        # (Cout,)
    bias = beta - running_mean * scale                                 # (Cout,)
    # OIHW -> (Cout, dy, dx, Cin) -> (Cout, 9*Cin); K order matches patches (tap-major).
    w2 = jnp.transpose(conv_w_oihw, (0, 2, 3, 1)).reshape(Cout, K) * scale[:, None]
    w_aug = jnp.concatenate(
        [w2, bias[:, None], jnp.zeros((Cout, Kpad - Kb), w2.dtype)], axis=1
    ).astype(jnp.bfloat16)                                             # (Cout, Kpad)

    cost = pl.CostEstimate(
        flops=2 * N * Cout * Kpad * M,
        transcendentals=0,
        bytes_accessed=N * Kpad * M * 2 + Cout * Kpad * 2 + N * Cout * M * 4,
    )

    out = pl.pallas_call(
        _irl_block_kernel,
        out_shape=jax.ShapeDtypeStruct((N, Cout, M), jnp.float32),
        grid=(N,),
        in_specs=[
            pl.BlockSpec((1, Kpad, M), lambda n: (n, 0, 0)),   # per-image patch slab
            pl.BlockSpec((Cout, Kpad), lambda n: (0, 0)),      # resident weight slab
        ],
        out_specs=pl.BlockSpec((1, Cout, M), lambda n: (n, 0, 0)),
        compiler_params=pltpu.CompilerParams(
            # "parallel": images shard across v7x's 2 TensorCores; pipelined DMA.
            dimension_semantics=("parallel",)),
        cost_estimate=cost,
        # vmem_limit_bytes left at default: whole working set is tiny here.
        # Re-derive tiles + set vmem_limit_bytes explicitly at production shapes
        # (v7x has 64 MiB physical VMEM vs 128 MiB on v5e/v6e).
    )(patches, w_aug)

    # Output is already channel-major (N, Cout, H*W): reshape only, no transpose.
    return out.reshape(N, Cout, H, W)


def _reference_forward(x_nchw, conv_w_oihw, gamma, beta, running_mean, running_var,
                       eps=1e-5):
    """Pure-JAX f32 reference (lax conv) for the correctness check."""
    x_nhwc = jnp.transpose(x_nchw, (0, 2, 3, 1))
    w_hwio = jnp.transpose(conv_w_oihw, (2, 3, 1, 0))
    y = jax.lax.conv_general_dilated(
        x_nhwc, w_hwio, window_strides=(1, 1), padding="SAME",
        dimension_numbers=("NHWC", "HWIO", "NHWC"))
    scale = gamma / jnp.sqrt(running_var + eps)
    bias = beta - running_mean * scale
    y = y * scale + bias
    y = jnp.where(y > 0, y, 0.1 * y)
    return jnp.transpose(y, (0, 3, 1, 2))


if __name__ == "__main__":
    # Small shapes consistent with the module: inplanes=4, planes=8, 16x16 images.
    N, Cin, Cout, H, W = 2, 4, 8, 16, 16

    key = jax.random.PRNGKey(0)
    k_x, k_w, k_g, k_b, k_m, k_v = jax.random.split(key, 6)

    x = jax.random.normal(k_x, (N, Cin, H, W), dtype=jnp.float32)
    conv_w = jax.random.normal(k_w, (Cout, Cin, 3, 3), dtype=jnp.float32) * 0.1
    gamma = 1.0 + 0.1 * jax.random.normal(k_g, (Cout,), dtype=jnp.float32)
    beta = 0.1 * jax.random.normal(k_b, (Cout,), dtype=jnp.float32)
    running_mean = 0.1 * jax.random.normal(k_m, (Cout,), dtype=jnp.float32)
    running_var = jnp.abs(jax.random.normal(k_v, (Cout,), dtype=jnp.float32)) + 0.5

    out = irl_block_forward(x, conv_w, gamma, beta, running_mean, running_var)
    out = jax.block_until_ready(out)

    ref = _reference_forward(x, conv_w, gamma, beta, running_mean, running_var)
    # bf16 MXU operands with f32 accumulation: loosened (expected) tolerance.
    np.testing.assert_allclose(np.asarray(out), np.asarray(ref), rtol=5e-2, atol=5e-2)

    assert out.shape == (N, Cout, H, W)
    print("KERNEL_OK")
</pallas_src>

<mosaic_0001>
module attributes {stable_mosaic.version = 11 : i64} {
  func.func @_irl_block_kernel(%arg0: i32, %arg1: memref<1x48x256xbf16, #tpu.memory_space<vmem>>, %arg2: memref<8x48xbf16, #tpu.memory_space<vmem>>, %arg3: memref<1x8x256xf32, #tpu.memory_space<vmem>>) attributes {dimension_semantics = [#tpu.dimension_semantics<parallel>], iteration_bounds = array<i64: 2>, scalar_prefetch = 0 : i64, scratch_operands = 0 : i64, tpu.core_type = #tpu.core_type<tc>, window_params = [{transform_indices = @transform_0, window_bounds = array<i64: 1, 48, 256>}, {pipeline_mode = #tpu.pipeline_mode<synchronous>, transform_indices = @transform_1, window_bounds = array<i64: 8, 48>}, {transform_indices = @transform_2, window_bounds = array<i64: 1, 8, 256>}]} {
    %c0 = arith.constant 0 : index
    %c0_0 = arith.constant 0 : index
    %0 = vector.load %arg2[%c0, %c0_0] : memref<8x48xbf16, #tpu.memory_space<vmem>>, vector<8x48xbf16>
    %c0_1 = arith.constant 0 : index
    %c0_2 = arith.constant 0 : index
    %c0_3 = arith.constant 0 : index
    %1 = vector.load %arg1[%c0_1, %c0_2, %c0_3] : memref<1x48x256xbf16, #tpu.memory_space<vmem>>, vector<1x48x256xbf16>
    %2 = vector.shape_cast %1 : vector<1x48x256xbf16> to vector<48x256xbf16>
    %cst = arith.constant dense<0.000000e+00> : vector<8x256xf32>
    %3 = tpu.matmul %0, %2, %cst {dimension_numbers = #tpu.dot_dimension_numbers<[1], [0], [0], [1], [0, 0, 1, 1], [], []>} : vector<8x48xbf16>, vector<48x256xbf16>, vector<8x256xf32> -> vector<8x256xf32>
    %cst_4 = arith.constant 1.000000e-01 : f32
    %4 = vector.broadcast %cst_4 : f32 to vector<8x256xf32>
    %5 = arith.mulf %4, %3 : vector<8x256xf32>
    %6 = arith.maximumf %3, %5 : vector<8x256xf32>
    %c0_5 = arith.constant 0 : index
    %c0_6 = arith.constant 0 : index
    %c0_7 = arith.constant 0 : index
    %7 = vector.load %arg3[%c0_5, %c0_6, %c0_7] : memref<1x8x256xf32, #tpu.memory_space<vmem>>, vector<1x8x256xf32>
    %8 = vector.shape_cast %7 : vector<1x8x256xf32> to vector<8x256xf32>
    %9 = vector.shape_cast %6 : vector<8x256xf32> to vector<1x8x256xf32>
    tpu.vector_store %arg3[%c0_5, %c0_6, %c0_7], %9 {strides = array<i32>} : memref<1x8x256xf32, #tpu.memory_space<vmem>>, vector<1x8x256xf32>,
    return
  }
  func.func @transform_0(%arg0: i32) -> (i32, i32, i32) {
    %c0_i32 = arith.constant 0 : i32
    %c0_i32_0 = arith.constant 0 : i32
    %c0_i32_1 = arith.constant 0 : i32
    return %arg0, %c0_i32, %c0_i32_0 : i32, i32, i32
  }
  func.func @transform_1(%arg0: i32) -> (i32, i32) {
    %c0_i32 = arith.constant 0 : i32
    %c0_i32_0 = arith.constant 0 : i32
    %c0_i32_1 = arith.constant 0 : i32
    return %c0_i32, %c0_i32_0 : i32, i32
  }
  func.func @transform_2(%arg0: i32) -> (i32, i32, i32) {
    %c0_i32 = arith.constant 0 : i32
    %c0_i32_0 = arith.constant 0 : i32
    %c0_i32_1 = arith.constant 0 : i32
    return %arg0, %c0_i32, %c0_i32_0 : i32, i32, i32
  }
}

</mosaic_0001>

<llo_original>
// kernel: tpu_custom_call.1
$region0: #{tpu_custom_call.1}
  #allocation0 [shape = 'u32[]', space=smem, size = 0x4, offset = 0x4, fixed_abs, tag = 'smem constant byte address 0x4 - core index']
  #allocation1 [shape = 'u32[144,128]{1,0:T(1,128)}', space=vmem, size = 0x12000, scoped, tag = 'internal scratch']
  %s0 = inlined_call_operand.hbm [shape: bf16[2,48,256], index: 0, kind: input, shape index: {}]
  %s1 = inlined_call_operand.hbm [shape: bf16[8,48], index: 1, kind: input, shape index: {}]
  %s2 = inlined_call_operand.hbm [shape: f32[2,8,256], index: 2, kind: output, shape index: {}]
  %s3 = sld [smem:[#allocation0]]
  $region49: #{tpu_custom_call.1} parent=0
    _
  %s5 = ssub.s32 1, %s3
  %s6 = scalar_select 0, %s5, %s3
  $region1: #{tpu_custom_call.1} parent=0
    #allocation2 [shape = 'u8[49152]{0}', space=vmem, size = 0xc000, scoped, tag = 'input window, operand 0']
    #allocation3 [shape = 's32[2]{0}', space=sflag, size = 0x8, scoped, tag = 'scoped memory for tpu_custom_call.1']
    #allocation4 [shape = 's32[2]{0}', space=sflag, size = 0x8, scoped, tag = 'scoped memory for tpu_custom_call.1']
    #allocation5 [shape = 'u8[2048]{0}', space=vmem, size = 0x800, scoped, tag = 'input window, operand 1, single buffered']
    #allocation6 [shape = 's32[1]{0}', space=sflag, size = 0x4, scoped, tag = 'scoped memory for tpu_custom_call.1']
    #allocation7 [shape = 'u8[16384]{0}', space=vmem, size = 0x4000, scoped, tag = 'output window, operand 0']
    %7 = vsyncpa [#allocation3], 0
    %s8 = scalar_lea.sflag [#allocation3], 1
    %9 = vsyncpa %s8, 0
    %10 = vsyncpa [#allocation6], 0
    %11 = vsyncpa [#allocation4], 0
    %s12 = scalar_lea.sflag [#allocation4], 1
    %13 = vsyncpa %s12, 0
    loop: start=0, step=1, limit=4
    $region2: #{tpu_custom_call.1} parent=1 // loop_pre_header
      _
    $region3: #{tpu_custom_call.1} parent=1 // loop_header
      %s15 = sphi 0, %s19
      %p16 = scmp.ge.s32.totalorder %s15, 4
      %s25 = sphi 0, %s27
      %s28 = sphi 0, %s25
      %s29 = sphi 0, %s28
      %s45 = sphi 0, %s29
      %s49 = sphi 0, %s49
      %s51 = sphi 0, %s49
      %s52 = sphi 0, %s51
      %s66 = sphi 0, %s52
      %s72 = sphi 0, %s74
      %s75 = sphi 0, %s72
      %s76 = sphi 0, %s75
      %s92 = sphi 0, %s76
    $region4: #{tpu_custom_call.1} parent=1 // loop_header_branch
      %18 = sbr.rel (%p16) target = $region8
    $region5: #{tpu_custom_call.1} parent=1 // loop_body
      %s20 = ssub.s32 %s15, 1
      %s21 = ssub.s32 %s15, 2
      %s22 = sadd.s32 %s15, 1
      %s23 = ssub.s32 %s15, %s22
      %p24 = scmp.eq.s32.totalorder %s23, 0
      %s26 = sadd.s32 %s25, 1
      %s27 = scalar_select %p24, %s25, %s26
      %p30 = pneg %p24
      %p31 = scmp.eq.s32.totalorder %s15, 1
      %p32 = por %p30, %p31
      %p33 = scmp.ne.s32.totalorder %s25, %s28
      %p34 = scmp.eq.s32.totalorder %s15, 0
      %p35 = por %p33, %p34
      %p36 = scmp.ne.s32.totalorder %s25, %s28
      %p37 = scmp.eq.s32.totalorder %s20, 1
      %p38 = por %p36, %p37
      %p39 = scmp.ne.s32.totalorder %s28, %s29
      %p40 = scmp.eq.s32.totalorder %s20, 0
      %p41 = por %p39, %p40
      %p42 = scmp.ne.s32.totalorder %s28, %s29
      %p43 = scmp.eq.s32.totalorder %s21, 1
      %p44 = por %p42, %p43
      %p46 = scmp.ne.s32.totalorder %s29, %s45
      %p47 = scmp.eq.s32.totalorder %s21, 0
      %p48 = por %p46, %p47
      %s50 = sadd.s32 %s49, 1
      %p53 = scmp.eq.s32.totalorder %s15, 1
      %p54 = scmp.ne.s32.totalorder %s49, %s51
      %p55 = scmp.eq.s32.totalorder %s15, 0
      %p56 = por %p54, %p55
      %p57 = scmp.ne.s32.totalorder %s49, %s51
      %p58 = scmp.eq.s32.totalorder %s20, 1
      %p59 = por %p57, %p58
      %p60 = scmp.ne.s32.totalorder %s51, %s52
      %p61 = scmp.eq.s32.totalorder %s20, 0
      %p62 = por %p60, %p61
      %p63 = scmp.ne.s32.totalorder %s51, %s52
      %p64 = scmp.eq.s32.totalorder %s21, 1
      %p65 = por %p63, %p64
      %p67 = scmp.ne.s32.totalorder %s52, %s66
      %p68 = scmp.eq.s32.totalorder %s21, 0
      %p69 = por %p67, %p68
      %s70 = ssub.s32 %s15, %s22
      %p71 = scmp.eq.s32.totalorder %s70, 0
      %s73 = sadd.s32 %s72, 1
      %s74 = scalar_select %p71, %s72, %s73
      %p77 = pneg %p71
      %p78 = scmp.eq.s32.totalorder %s15, 1
      %p79 = por %p77, %p78
      %p80 = scmp.ne.s32.totalorder %s72, %s75
      %p81 = scmp.eq.s32.totalorder %s15, 0
      %p82 = por %p80, %p81
      %p83 = scmp.ne.s32.totalorder %s72, %s75
      %p84 = scmp.eq.s32.totalorder %s20, 1
      %p85 = por %p83, %p84
      %p86 = scmp.ne.s32.totalorder %s75, %s76
      %p87 = scmp.eq.s32.totalorder %s20, 0
      %p88 = por %p86, %p87
      %p89 = scmp.ne.s32.totalorder %s75, %s76
      %p90 = scmp.eq.s32.totalorder %s21, 1
      %p91 = por %p89, %p90
      %p93 = scmp.ne.s32.totalorder %s76, %s92
      %p94 = scmp.eq.s32.totalorder %s21, 0
      %p95 = por %p93, %p94
      %p96 = scmp.le.s32.totalorder 1, %s15
      %p97 = scmp.lt.s32.totalorder %s15, 3
      %p98 = pnand %p96, %p97
      %p99 = pneg %p98
      // Predicated region
      $region9: #{tpu_custom_call.1} parent=5 // pred_check
        _
      $region10: #{tpu_custom_call.1} parent=5 // pred_check_branch
        %101 = sbr.rel (%p98) target = $region12
      $region11: #{tpu_custom_call.1} parent=5 // pred_region
        %s102 = ssub.s32 %s15, 1
        // Predicated region
        $region13: #{tpu_custom_call.1} parent=11 // pred_check
          %p103 = pneg %p62
        $region14: #{tpu_custom_call.1} parent=11 // pred_check_branch
          %105 = sbr.rel (%p103) target = $region16
        $region15: #{tpu_custom_call.1} parent=11 // pred_region
          %s107 = ssub.s32 64, 64
          %108 = vsyncadd [#allocation6], %s107
          %s110 = sshll.u32 [#allocation5], 4
          %s111 = int_to_ptr.vmem [resolvable:$true] %s110
          %113 = dma.hbm_to_vmem [thread:$0]  %s1, 64, %s111, [#allocation6]
        $region16: #{tpu_custom_call.1} parent=11 // pred_fallthru
          _
      $region12: #{tpu_custom_call.1} parent=5 // pred_fallthru
        _
      %p114 = scmp.lt.s32.totalorder %s15, 2
      // Predicated region
      $region17: #{tpu_custom_call.1} parent=5 // pred_check
        %p115 = pneg %p114
      $region18: #{tpu_custom_call.1} parent=5 // pred_check_branch
        %117 = sbr.rel (%p115) target = $region20
      $region19: #{tpu_custom_call.1} parent=5 // pred_region
        // Predicated region
        $region21: #{tpu_custom_call.1} parent=19 // pred_check
          %p118 = pneg %p35
        $region22: #{tpu_custom_call.1} parent=19 // pred_check_branch
          %120 = sbr.rel (%p118) target = $region24
        $region23: #{tpu_custom_call.1} parent=19 // pred_region
          %s121 = sand.u32 %s25, 1
          %s122 = scalar_lea.sflag [#allocation3], %s121
          %s123 = sand.u32 %s25, 1
          %s124 = smul.addr %s123, 48
          %s125 = scalar_lea.vmem [#allocation2], %s124
          %s127 = ssub.s32 768, 768
          %128 = vsyncadd %s122, %s127
          %s129 = smul.addr %s15, 12
          %s130 = smul.addr %s129, 64
          %s131 = scalar_lea.hbm %s0, %s130
          %s132 = sshll.u32 %s125, 4
          %s133 = int_to_ptr.vmem [resolvable:$true] %s132
          %138 = dma.hbm_to_vmem [thread:$0]  %s131, 768, %s133, %s122, 128, 128, 8
        $region24: #{tpu_custom_call.1} parent=19 // pred_fallthru
          _
      $region20: #{tpu_custom_call.1} parent=5 // pred_fallthru
        _
      %p139 = scmp.le.s32.totalorder 1, %s15
      %p140 = scmp.lt.s32.totalorder %s15, 3
      %p141 = pnand %p139, %p140
      %p142 = pneg %p141
      // Predicated region
      $region25: #{tpu_custom_call.1} parent=5 // pred_check
        _
      $region26: #{tpu_custom_call.1} parent=5 // pred_check_branch
        %144 = sbr.rel (%p141) target = $region28
      $region27: #{tpu_custom_call.1} parent=5 // pred_region
        %s145 = ssub.s32 %s15, 1
        %s146 = sand.u32 %s28, 1
        %s147 = scalar_lea.sflag [#allocation3], %s146
        %s148 = sand.u32 %s28, 1
        %s149 = smul.addr %s148, 48
        %s150 = scalar_lea.vmem [#allocation2], %s149
        // Predicated region
        $region29: #{tpu_custom_call.1} parent=27 // pred_check
          %p151 = pneg %p41
        $region30: #{tpu_custom_call.1} parent=27 // pred_check_branch
          %153 = sbr.rel (%p151) target = $region32
        $region31: #{tpu_custom_call.1} parent=27 // pred_region
          %154 = dma.done %s147, 768
        $region32: #{tpu_custom_call.1} parent=27 // pred_fallthru
          _
        // Predicated region
        $region33: #{tpu_custom_call.1} parent=27 // pred_check
          %p155 = pneg %p62
        $region34: #{tpu_custom_call.1} parent=27 // pred_check_branch
          %157 = sbr.rel (%p155) target = $region36
        $region35: #{tpu_custom_call.1} parent=27 // pred_region
          %158 = dma.done [#allocation6], 64
        $region36: #{tpu_custom_call.1} parent=27 // pred_fallthru
          _
        %s159 = sand.u32 %s28, 1
        %s160 = scalar_lea.sflag [#allocation3], %s159
        %s161 = sand.u32 %s28, 1
        %s162 = smul.addr %s161, 48
        %s163 = scalar_lea.vmem [#allocation2], %s162
        %p164 = pneg %p41
        %p165 = pneg %p38
        %p166 = pneg %p62
        %p167 = pneg %p59
        %p168 = pneg %p88
        %p169 = pneg %p85
        %s170 = sand.u32 %s75, 1
        %s171 = scalar_lea.sflag [#allocation4], %s170
        %s172 = sand.u32 %s75, 1
        %s173 = smul.addr %s172, 16
        %s174 = scalar_lea.vmem [#allocation7], %s173
        %v176 = vld [vmem:[#allocation5] sm:$0xf]
        %v177 = vld [vmem:[%s150] sm:$0xff]
        %v178 = vld [vmem:[%s150 + $0x8] sm:$0xff]
        %v179 = vld [vmem:[%s150 + $0x10] sm:$0xff]
        %v180 = vld [vmem:[%s150 + $0x18] sm:$0xff]
        %v181 = vld [vmem:[%s150 + $0x20] sm:$0xff]
        %v182 = vld [vmem:[%s150 + $0x28] sm:$0xff]
        %v189 = vunpack.c.l.b16 %v177
        %v190 = vunpack.c.h.b16 %v177
        %v191 = vunpack.c.l.b16 %v178
        %v192 = vunpack.c.h.b16 %v178
        %v193 = vunpack.c.l.b16 %v179
        %v194 = vunpack.c.h.b16 %v179
        %v195 = vunpack.c.l.b16 %v180
        %v196 = vunpack.c.h.b16 %v180
        %v197 = vunpack.c.l.b16 %v181
        %v198 = vunpack.c.h.b16 %v181
        %v199 = vunpack.c.l.b16 %v182
        %v200 = vunpack.c.h.b16 %v182
        %v201 = vpack.c.b16 %v191, %v189
        %v202 = vpack.c.b16 %v192, %v190
        %v203 = vpack.c.b16 %v195, %v193
        %v204 = vpack.c.b16 %v196, %v194
        %v205 = vpack.c.b16 %v199, %v197
        %v206 = vpack.c.b16 %v200, %v198
        %vm213 = vcmask 392192
        %v215 = vsel %vm213, %v176, 0
        %217 = vmatprep.subr.bf16.mxu0 %v202
        %218 = vmatpush1.bf16.msra.mxu0 %v201
        %219 = vmatprep.subr.bf16.mxu0 %v204
        %220 = vmatpush1.bf16.msra.mxu0 %v203
        %221 = vmatprep.subr.bf16.mxu0 %v206
        %222 = vmatpush1.bf16.msra.mxu0 %v205
        %223 = vmatprep.subr.bf16.mxu0 0
        %224 = vmatpush1.bf16.msra.mxu0 0
        %225 = vmatprep.subr.bf16.mxu0 0
        %226 = vmatpush1.bf16.msra.mxu0 0
        %227 = vmatprep.subr.bf16.mxu0 0
        %228 = vmatpush1.bf16.msra.mxu0 0
        %229 = vmatprep.subr.bf16.mxu0 0
        %230 = vmatpush1.bf16.msra.mxu0 0
        %231 = vmatprep.subr.bf16.mxu0 0
        %232 = vmatpush1.bf16.msra.mxu0 0
        %233 = vmatprep.subr.bf16.mxu0 0
        %234 = vmatpush1.bf16.msra.mxu0 0
        %235 = vmatprep.subr.bf16.mxu0 0
        %236 = vmatpush1.bf16.msra.mxu0 0
        %237 = vmatprep.subr.bf16.mxu0 0
        %238 = vmatpush1.bf16.msra.mxu0 0
        %239 = vmatprep.subr.bf16.mxu0 0
        %240 = vmatpush1.bf16.msra.mxu0 0
        %241 = vmatprep.subr.bf16.mxu0 0
        %242 = vmatpush1.bf16.msra.mxu0 0
        %243 = vmatprep.subr.bf16.mxu0 0
        %244 = vmatpush1.bf16.msra.mxu0 0
        %245 = vmatprep.subr.bf16.mxu0 0
        %246 = vmatpush1.bf16.msra.mxu0 0
        %247 = vmatprep.subr.bf16.mxu0 0
        %248 = vmatpush1.bf16.msra.mxu0 0
        %249 = vmatprep.mubr.bf16.mxu0 0
        %250 = vmatmul.mubr.bf16.gmra.mrb[0].mxu0 %v215
        %v251 = vpop.f32.mrb[0].mxu0
        %v252 = vadd.f32 0.0, %v251
        %v253 = vpop.f32.mrb[0].mxu0
        %v254 = vadd.f32 0.0, %v253
        %v255 = vpop.f32.mrb[0].mxu0
        %v256 = vpop.f32.mrb[0].mxu0
        %257 = vdwg.mxu0
        %v258 = vmul.f32 %v252, 0.1
        %v259 = vmul.f32 %v254, 0.1
        %v260 = vmax.f32 %v252, %v258
        %v261 = vmax.f32 %v254, %v259
        %262 = vst [vmem:[%s174] sm:$0xff] %v260
        %263 = vst [vmem:[%s174 + $0x8] sm:$0xff] %v261
        %s264 = sand.u32 %s75, 1
        %s265 = scalar_lea.sflag [#allocation4], %s264
        %s266 = sand.u32 %s75, 1
        %s267 = smul.addr %s266, 16
        %s268 = scalar_lea.vmem [#allocation7], %s267
        // Predicated region
        $region37: #{tpu_custom_call.1} parent=27 // pred_check
          %p269 = pneg %p85
        $region38: #{tpu_custom_call.1} parent=27 // pred_check_branch
          %271 = sbr.rel (%p269) target = $region40
        $region39: #{tpu_custom_call.1} parent=27 // pred_region
          %s273 = ssub.s32 256, 256
          %274 = vsyncadd %s265, %s273
          %s275 = smul.addr %s20, 2
          %s276 = smul.addr %s275, 128
          %s277 = scalar_lea.hbm %s2, %s276
          %s279 = sshll.u32 %s268, 4
          %s280 = int_to_ptr.vmem [resolvable:$true] %s279
          %282 = dma.vmem_to_hbm [thread:$0]  %s280, 256, %s277, %s265
        $region40: #{tpu_custom_call.1} parent=27 // pred_fallthru
          _
      $region28: #{tpu_custom_call.1} parent=5 // pred_fallthru
        _
      %p283 = scmp.le.s32.totalorder 2, %s15
      // Predicated region
      $region41: #{tpu_custom_call.1} parent=5 // pred_check
        %p284 = pneg %p283
      $region42: #{tpu_custom_call.1} parent=5 // pred_check_branch
        %286 = sbr.rel (%p284) target = $region44
      $region43: #{tpu_custom_call.1} parent=5 // pred_region
        %s287 = ssub.s32 %s15, 2
        // Predicated region
        $region45: #{tpu_custom_call.1} parent=43 // pred_check
          %p288 = pneg %p91
        $region46: #{tpu_custom_call.1} parent=43 // pred_check_branch
          %290 = sbr.rel (%p288) target = $region48
        $region47: #{tpu_custom_call.1} parent=43 // pred_region
          %s291 = sand.u32 %s76, 1
          %s292 = scalar_lea.sflag [#allocation4], %s291
          %s293 = sand.u32 %s76, 1
          %s294 = smul.addr %s293, 16
          %s295 = scalar_lea.vmem [#allocation7], %s294
          %296 = dma.done %s292, 256
        $region48: #{tpu_custom_call.1} parent=43 // pred_fallthru
          _
      $region44: #{tpu_custom_call.1} parent=5 // pred_fallthru
        _
    $region6: #{tpu_custom_call.1} parent=1 // loop_footer
      %s19 = sadd.s32 1, %s15
    $region7: #{tpu_custom_call.1} parent=1 // loop_footer_branch
      %14 = sbr.rel target = $region3
    $region8: #{tpu_custom_call.1} parent=1 // loop_exit
      _
    %297 = vsyncpa [#allocation3], 1
    %s298 = scalar_lea.sflag [#allocation3], 1
    %299 = vsyncpa %s298, 1
    %300 = vsyncpa [#allocation6], 1
    %301 = vsyncpa [#allocation4], 1
    %s302 = scalar_lea.sflag [#allocation4], 1
    %303 = vsyncpa %s302, 1

</llo_original>
